<compile_context>
chip_gen: v7x
topology: tpu7x:2x2x1
jax: 0.10.0
libtpu: 0.0.40
codegen_flags: <defaults>
</compile_context>

<pallas_src>
import functools

import jax
import jax.numpy as jnp
from jax.experimental import pallas as pl
from jax.experimental.pallas import tpu as pltpu

EPS = 1e-5


def _round_up(x, m):
    return (x + m - 1) // m * m


# ---------------------------------------------------------------------------
# Pass 1: BatchNorm2d(affine=False) training-mode batch statistics, tiled
# over the batch.  feat arrives channel-major, pixel-lane-dense: (N, Cf_p, P).
# Outputs rstd and mean*rstd (the BN subtract is folded into the epilogue).
# ---------------------------------------------------------------------------
def bn_stats_kernel(feat_ref, rstd_ref, mrstd_ref, sum_ref, sq_ref, *, count):
    n = pl.program_id(0)

    @pl.when(n == 0)
    def _():
        sum_ref[...] = jnp.zeros_like(sum_ref)
        sq_ref[...] = jnp.zeros_like(sq_ref)

    x = feat_ref[...].astype(jnp.float32)                        # (Cf_p, P)
    sum_ref[...] += jnp.sum(x, axis=1, keepdims=True)
    sq_ref[...] += jnp.sum(x * x, axis=1, keepdims=True)

    @pl.when(n == pl.num_programs(0) - 1)
    def _():
        inv_cnt = 1.0 / count
        mean = sum_ref[...] * inv_cnt
        var = jnp.maximum(sq_ref[...] * inv_cnt - mean * mean, 0.0)
        rstd = jax.lax.rsqrt(var + EPS)
        rstd_ref[...] = rstd
        mrstd_ref[...] = mean * rstd


# ---------------------------------------------------------------------------
# Pass 2: fused convs + SPADE epilogue.  One batch element per grid step.
# ---------------------------------------------------------------------------
def _im2col(x, masks, shifts):
    """'Same'-conv patch tensor via lane-roll + edge-mask.

    x:      (Cin_p, P) f32 (P = H*W on lanes).
    masks:  (T, P) f32 validity masks (resident, grid-invariant).
    shifts: T static lane roll amounts.
    Returns (T*Cin_p, P) bf16 patch tensor for a single im2col matmul.
    """
    taps = []
    for t, s in enumerate(shifts):
        shifted = x if s == 0 else pltpu.roll(x, shift=s, axis=1)
        taps.append(shifted * masks[t:t + 1])
    # concat on f32 (8-sublane aligned pieces -> free views), one cast to bf16
    return jnp.concatenate(taps, axis=0).astype(jnp.bfloat16)


def spade_kernel(label_ref, feat_ref, masks_ref, w_sh_ref, b_sh_ref,
                 w_gb_ref, b_gb_ref, rstd_ref, mrstd_ref, out_ref,
                 *, shifts, cf_p):
    masks = masks_ref[...]                                       # (T, P) f32

    # conv1: label -> hidden, single im2col matmul (K = T*Cl_p)
    patches = _im2col(label_ref[...].astype(jnp.float32), masks, shifts)
    hidden = jnp.dot(w_sh_ref[...], patches,
                     preferred_element_type=jnp.float32) + b_sh_ref[...]

    # conv2 (fused gamma||beta): hidden -> 2*Cf_p, single im2col matmul
    patches2 = _im2col(hidden, masks, shifts)
    gb = jnp.dot(w_gb_ref[...], patches2,
                 preferred_element_type=jnp.float32) + b_gb_ref[...]
    gamma1 = gb[:cf_p]          # sublane-aligned view ('1 + gamma' in the bias)
    beta = gb[cf_p:]            # sublane-aligned view

    # BatchNorm2d(affine=False) with folded subtract: x*rstd - mean*rstd
    norm = feat_ref[...].astype(jnp.float32) * rstd_ref[...] - mrstd_ref[...]
    out_ref[...] = (norm * gamma1 + beta).astype(out_ref.dtype)


# ---------------------------------------------------------------------------
# Wrapper
# ---------------------------------------------------------------------------
def _pack_conv_weights(w_hwio, cin_p, cout_p):
    """HWIO (ks,ks,Cin,Cout) -> (Cout_p, ks*ks*Cin_p), tap-major / channel-minor."""
    ks, _, cin, cout = w_hwio.shape
    w = jnp.transpose(w_hwio, (3, 0, 1, 2))                      # (Cout,ks,ks,Cin)
    w = jnp.pad(w, ((0, cout_p - cout), (0, 0), (0, 0), (0, cin_p - cin)))
    return w.reshape(cout_p, ks * ks * cin_p)


def _full_spec(shape):
    zeros = (0,) * len(shape)
    return pl.BlockSpec(shape, lambda n: zeros)


def _vmem_limit_bytes():
    # ~96 MiB on v5e/v6e (128 MiB physical VMEM), ~48 MiB on v7x (64 MiB).
    try:
        cap = int(getattr(pltpu.get_tpu_info(), "vmem_capacity_bytes",
                          64 * 1024 * 1024))
    except Exception:
        cap = 64 * 1024 * 1024
    return min(100 * 1024 * 1024, (cap * 3) // 4)


def spade_forward(feat, label, params, ks):
    """feat: (N,H,W,feat_nc), label: (N,H,W,label_nc), NHWC. Returns NHWC f32."""
    N, H, W, Cf = feat.shape
    Cl = label.shape[-1]
    Ch = params["w_shared"].shape[-1]
    P = H * W                      # multiple of 128 here -> lane-dense stores
    pw = ks // 2

    # sublane-aligned channel padding (free views for concat / gamma-beta split)
    Cf_p = _round_up(Cf, 8)
    Cl_p = _round_up(Cl, 8)
    Ch_p = _round_up(Ch, 8)

    # channel-major, pixel-lane-dense layouts (layout plumbing stays in XLA)
    feat_t = jnp.pad(feat.transpose(0, 3, 1, 2).reshape(N, Cf, P),
                     ((0, 0), (0, Cf_p - Cf), (0, 0)))
    label_t = jnp.pad(label.transpose(0, 3, 1, 2).reshape(N, Cl, P),
                      ((0, 0), (0, Cl_p - Cl), (0, 0)))

    # im2col weights (bf16 once); gamma/beta fused along Cout, '+1' in bias
    w_sh = _pack_conv_weights(params["w_shared"], Cl_p, Ch_p).astype(jnp.bfloat16)
    w_gb = jnp.concatenate(
        [_pack_conv_weights(params["w_gamma"], Ch_p, Cf_p),
         _pack_conv_weights(params["w_beta"], Ch_p, Cf_p)], axis=0
    ).astype(jnp.bfloat16)                                       # (2Cf_p, T*Ch_p)
    b_sh = jnp.pad(params["b_shared"].reshape(-1), (0, Ch_p - Ch)).reshape(Ch_p, 1)
    b_gb = jnp.concatenate(
        [jnp.pad(params["b_gamma"].reshape(-1), (0, Cf_p - Cf)) + 1.0,
         jnp.pad(params["b_beta"].reshape(-1), (0, Cf_p - Cf))], axis=0
    ).reshape(2 * Cf_p, 1)

    # grid-invariant 'same'-padding taps: lane-roll shifts + edge-validity masks
    q = jnp.arange(P, dtype=jnp.int32)
    hh, ww = q // W, q % W
    shifts, mask_rows = [], []
    for ky in range(ks):
        for kx in range(ks):
            dy, dx = ky - pw, kx - pw
            shifts.append(int((-(dy * W + dx)) % P))
            mask_rows.append((hh + dy >= 0) & (hh + dy < H) &
                             (ww + dx >= 0) & (ww + dx < W))
    masks = jnp.stack(mask_rows, axis=0).astype(jnp.float32)     # (T, P)
    shifts = tuple(shifts)

    vmem_limit = _vmem_limit_bytes()

    # ----- pass 1: BN batch statistics, tiled over the batch ---------------
    rstd, mrstd = pl.pallas_call(
        functools.partial(bn_stats_kernel, count=float(N * P)),
        out_shape=(jax.ShapeDtypeStruct((Cf_p, 1), jnp.float32),
                   jax.ShapeDtypeStruct((Cf_p, 1), jnp.float32)),
        grid=(N,),
        in_specs=[pl.BlockSpec((None, Cf_p, P), lambda n: (n, 0, 0))],
        out_specs=(pl.BlockSpec((Cf_p, 1), lambda n: (0, 0)),
                   pl.BlockSpec((Cf_p, 1), lambda n: (0, 0))),
        scratch_shapes=[pltpu.VMEM((Cf_p, 1), jnp.float32),
                        pltpu.VMEM((Cf_p, 1), jnp.float32)],
        compiler_params=pltpu.CompilerParams(
            dimension_semantics=("arbitrary",),
            vmem_limit_bytes=vmem_limit),
    )(feat_t)

    # ----- pass 2: fused convs + SPADE epilogue, parallel grid over batch --
    kern = functools.partial(spade_kernel, shifts=shifts, cf_p=Cf_p)
    out_t = pl.pallas_call(
        kern,
        out_shape=jax.ShapeDtypeStruct((N, Cf_p, P), jnp.float32),
        grid=(N,),
        in_specs=[
            pl.BlockSpec((None, Cl_p, P), lambda n: (n, 0, 0)),   # label
            pl.BlockSpec((None, Cf_p, P), lambda n: (n, 0, 0)),   # feat
            _full_spec(masks.shape),                              # tap masks
            _full_spec(w_sh.shape), _full_spec(b_sh.shape),
            _full_spec(w_gb.shape), _full_spec(b_gb.shape),
            _full_spec((Cf_p, 1)),                                # rstd
            _full_spec((Cf_p, 1)),                                # mean*rstd
        ],
        out_specs=pl.BlockSpec((None, Cf_p, P), lambda n: (n, 0, 0)),
        compiler_params=pltpu.CompilerParams(
            dimension_semantics=("parallel",),
            vmem_limit_bytes=vmem_limit),
    )(label_t, feat_t, masks, w_sh, b_sh, w_gb, b_gb, rstd, mrstd)

    # back to NHWC, drop channel padding
    return out_t[:, :Cf].reshape(N, Cf, H, W).transpose(0, 2, 3, 1)


# ---------------------------------------------------------------------------
# plain-JAX reference (same math, XLA conv) for a correctness check
# ---------------------------------------------------------------------------
def spade_reference(feat, label, params):
    def conv(x, w, b):
        y = jax.lax.conv_general_dilated(
            x, w, window_strides=(1, 1), padding="SAME",
            dimension_numbers=("NHWC", "HWIO", "NHWC"))
        return y + b.reshape(1, 1, 1, -1)

    hidden = conv(label, params["w_shared"], params["b_shared"])
    gamma = conv(hidden, params["w_gamma"], params["b_gamma"])
    beta = conv(hidden, params["w_beta"], params["b_beta"])
    mean = feat.mean(axis=(0, 1, 2), keepdims=True)
    var = ((feat - mean) ** 2).mean(axis=(0, 1, 2), keepdims=True)
    norm = (feat - mean) / jnp.sqrt(var + EPS)
    return norm * (1.0 + gamma) + beta


def init_params(key, feat_nc, label_nc, hidden_nc, ks):
    ks_ = (ks, ks)
    k = jax.random.split(key, 6)
    scale = 0.1
    return {
        "w_shared": scale * jax.random.normal(k[0], (*ks_, label_nc, hidden_nc), jnp.float32),
        "b_shared": scale * jax.random.normal(k[1], (1, hidden_nc), jnp.float32),
        "w_gamma": scale * jax.random.normal(k[2], (*ks_, hidden_nc, feat_nc), jnp.float32),
        "b_gamma": scale * jax.random.normal(k[3], (1, feat_nc), jnp.float32),
        "w_beta": scale * jax.random.normal(k[4], (*ks_, hidden_nc, feat_nc), jnp.float32),
        "b_beta": scale * jax.random.normal(k[5], (1, feat_nc), jnp.float32),
    }


if __name__ == "__main__":
    key = jax.random.PRNGKey(0)
    k_feat, k_label, k_param = jax.random.split(key, 3)

    # small shapes: N=2, feat_nc=4, label_nc=3, hidden_nc=8, H=W=16, ks=3
    N, H, W = 2, 16, 16
    feat_nc, label_nc, hidden_nc, ks = 4, 3, 8, 3

    feat = jax.random.normal(k_feat, (N, H, W, feat_nc), jnp.float32)
    label = jax.random.normal(k_label, (N, H, W, label_nc), jnp.float32)
    params = init_params(k_param, feat_nc, label_nc, hidden_nc, ks)

    out = jax.block_until_ready(spade_forward(feat, label, params, ks))
    ref = jax.block_until_ready(spade_reference(feat, label, params))

    assert out.shape == (N, H, W, feat_nc)
    # bf16 MXU operands (f32 accumulation) across two chained convs
    assert jnp.allclose(out, ref, atol=5e-2, rtol=5e-2), (
        f"max abs err {jnp.max(jnp.abs(out - ref))}")

    print("KERNEL_OK")
</pallas_src>

<mosaic_0001>
module attributes {stable_mosaic.version = 11 : i64} {
  func.func @bn_stats_kernel(%arg0: i32, %arg1: memref<1x8x256xf32, #tpu.memory_space<vmem>>, %arg2: memref<8x1xf32, #tpu.memory_space<vmem>>, %arg3: memref<8x1xf32, #tpu.memory_space<vmem>>, %arg4: memref<8x1xf32, #tpu.memory_space<vmem>>, %arg5: memref<8x1xf32, #tpu.memory_space<vmem>>) attributes {dimension_semantics = [#tpu.dimension_semantics<arbitrary>], iteration_bounds = array<i64: 2>, scalar_prefetch = 0 : i64, scratch_operands = 2 : i64, tpu.core_type = #tpu.core_type<tc>, window_params = [{transform_indices = @transform_0, window_bounds = array<i64: 1, 8, 256>}, {pipeline_mode = #tpu.pipeline_mode<synchronous>, transform_indices = @transform_1, window_bounds = array<i64: 8, 1>}, {pipeline_mode = #tpu.pipeline_mode<synchronous>, transform_indices = @transform_2, window_bounds = array<i64: 8, 1>}]} {
    %c0_i32 = arith.constant 0 : i32
    %0 = arith.cmpi eq, %arg0, %c0_i32 : i32
    %1 = arith.extui %0 : i1 to i32
    %c0_i32_0 = arith.constant 0 : i32
    %2 = arith.cmpi ne, %1, %c0_i32_0 : i32
    scf.if %2 {
      %cst_13 = arith.constant 0.000000e+00 : f32
      %19 = vector.broadcast %cst_13 : f32 to vector<8x1xf32>
      %c0_14 = arith.constant 0 : index
      %c0_15 = arith.constant 0 : index
      %20 = vector.load %arg4[%c0_14, %c0_15] : memref<8x1xf32, #tpu.memory_space<vmem>>, vector<8x1xf32>
      tpu.vector_store %arg4[%c0_14, %c0_15], %19 {strides = array<i32>} : memref<8x1xf32, #tpu.memory_space<vmem>>, vector<8x1xf32>,
      %cst_16 = arith.constant 0.000000e+00 : f32
      %21 = vector.broadcast %cst_16 : f32 to vector<8x1xf32>
      %c0_17 = arith.constant 0 : index
      %c0_18 = arith.constant 0 : index
      %22 = vector.load %arg5[%c0_17, %c0_18] : memref<8x1xf32, #tpu.memory_space<vmem>>, vector<8x1xf32>
      tpu.vector_store %arg5[%c0_17, %c0_18], %21 {strides = array<i32>} : memref<8x1xf32, #tpu.memory_space<vmem>>, vector<8x1xf32>,
    } else {
    }
    %c0 = arith.constant 0 : index
    %c0_1 = arith.constant 0 : index
    %c0_2 = arith.constant 0 : index
    %3 = vector.load %arg1[%c0, %c0_1, %c0_2] : memref<1x8x256xf32, #tpu.memory_space<vmem>>, vector<1x8x256xf32>
    %4 = vector.shape_cast %3 : vector<1x8x256xf32> to vector<8x256xf32>
    %c0_3 = arith.constant 0 : index
    %c0_4 = arith.constant 0 : index
    %5 = vector.load %arg4[%c0_3, %c0_4] : memref<8x1xf32, #tpu.memory_space<vmem>>, vector<8x1xf32>
    %cst = arith.constant dense<0.000000e+00> : vector<8xf32>
    %6 = vector.multi_reduction <add>, %4, %cst [1] : vector<8x256xf32> to vector<8xf32>
    %7 = vector.shape_cast %6 : vector<8xf32> to vector<8x1xf32>
    %8 = arith.addf %5, %7 : vector<8x1xf32>
    %c0_5 = arith.constant 0 : index
    %c0_6 = arith.constant 0 : index
    %9 = vector.load %arg4[%c0_5, %c0_6] : memref<8x1xf32, #tpu.memory_space<vmem>>, vector<8x1xf32>
    tpu.vector_store %arg4[%c0_5, %c0_6], %8 {strides = array<i32>} : memref<8x1xf32, #tpu.memory_space<vmem>>, vector<8x1xf32>,
    %c0_7 = arith.constant 0 : index
    %c0_8 = arith.constant 0 : index
    %10 = vector.load %arg5[%c0_7, %c0_8] : memref<8x1xf32, #tpu.memory_space<vmem>>, vector<8x1xf32>
    %11 = arith.mulf %4, %4 : vector<8x256xf32>
    %cst_9 = arith.constant dense<0.000000e+00> : vector<8xf32>
    %12 = vector.multi_reduction <add>, %11, %cst_9 [1] : vector<8x256xf32> to vector<8xf32>
    %13 = vector.shape_cast %12 : vector<8xf32> to vector<8x1xf32>
    %14 = arith.addf %10, %13 : vector<8x1xf32>
    %c0_10 = arith.constant 0 : index
    %c0_11 = arith.constant 0 : index
    %15 = vector.load %arg5[%c0_10, %c0_11] : memref<8x1xf32, #tpu.memory_space<vmem>>, vector<8x1xf32>
    tpu.vector_store %arg5[%c0_10, %c0_11], %14 {strides = array<i32>} : memref<8x1xf32, #tpu.memory_space<vmem>>, vector<8x1xf32>,
    %c1_i32 = arith.constant 1 : i32
    %16 = arith.cmpi eq, %arg0, %c1_i32 : i32
    %17 = arith.extui %16 : i1 to i32
    %c0_i32_12 = arith.constant 0 : i32
    %18 = arith.cmpi ne, %17, %c0_i32_12 : i32
    scf.if %18 {
      %c0_13 = arith.constant 0 : index
      %c0_14 = arith.constant 0 : index
      %19 = vector.load %arg4[%c0_13, %c0_14] : memref<8x1xf32, #tpu.memory_space<vmem>>, vector<8x1xf32>
      %cst_15 = arith.constant 0.001953125 : f32
      %20 = vector.broadcast %cst_15 : f32 to vector<8x1xf32>
      %21 = arith.mulf %19, %20 : vector<8x1xf32>
      %c0_16 = arith.constant 0 : index
      %c0_17 = arith.constant 0 : index
      %22 = vector.load %arg5[%c0_16, %c0_17] : memref<8x1xf32, #tpu.memory_space<vmem>>, vector<8x1xf32>
      %cst_18 = arith.constant 0.001953125 : f32
      %23 = vector.broadcast %cst_18 : f32 to vector<8x1xf32>
      %24 = arith.mulf %22, %23 : vector<8x1xf32>
      %25 = arith.mulf %21, %21 : vector<8x1xf32>
      %26 = arith.subf %24, %25 : vector<8x1xf32>
      %cst_19 = arith.constant 0.000000e+00 : f32
      %27 = vector.broadcast %cst_19 : f32 to vector<8x1xf32>
      %28 = arith.maximumf %26, %27 : vector<8x1xf32>
      %cst_20 = arith.constant 9.99999974E-6 : f32
      %29 = vector.broadcast %cst_20 : f32 to vector<8x1xf32>
      %30 = arith.addf %28, %29 : vector<8x1xf32>
      %31 = math.rsqrt %30 : vector<8x1xf32>
      %c0_21 = arith.constant 0 : index
      %c0_22 = arith.constant 0 : index
      %32 = vector.load %arg2[%c0_21, %c0_22] : memref<8x1xf32, #tpu.memory_space<vmem>>, vector<8x1xf32>
      tpu.vector_store %arg2[%c0_21, %c0_22], %31 {strides = array<i32>} : memref<8x1xf32, #tpu.memory_space<vmem>>, vector<8x1xf32>,
      %33 = arith.mulf %21, %31 : vector<8x1xf32>
      %c0_23 = arith.constant 0 : index
      %c0_24 = arith.constant 0 : index
      %34 = vector.load %arg3[%c0_23, %c0_24] : memref<8x1xf32, #tpu.memory_space<vmem>>, vector<8x1xf32>
      tpu.vector_store %arg3[%c0_23, %c0_24], %33 {strides = array<i32>} : memref<8x1xf32, #tpu.memory_space<vmem>>, vector<8x1xf32>,
    } else {
    }
    return
  }
  func.func @transform_0(%arg0: i32) -> (i32, i32, i32) {
    %c0_i32 = arith.constant 0 : i32
    %c0_i32_0 = arith.constant 0 : i32
    %c0_i32_1 = arith.constant 0 : i32
    return %arg0, %c0_i32, %c0_i32_0 : i32, i32, i32
  }
  func.func @transform_1(%arg0: i32) -> (i32, i32) {
    %c0_i32 = arith.constant 0 : i32
    %c0_i32_0 = arith.constant 0 : i32
    %c0_i32_1 = arith.constant 0 : i32
    return %c0_i32, %c0_i32_0 : i32, i32
  }
  func.func @transform_2(%arg0: i32) -> (i32, i32) {
    %c0_i32 = arith.constant 0 : i32
    %c0_i32_0 = arith.constant 0 : i32
    %c0_i32_1 = arith.constant 0 : i32
    return %c0_i32, %c0_i32_0 : i32, i32
  }
}

</mosaic_0001>

<llo_original>
// kernel: tpu_custom_call.1
$region0: #{tpu_custom_call.1}
  #allocation0 [shape = 'u32[]', space=smem, size = 0x4, offset = 0x4, fixed_abs, tag = 'smem constant byte address 0x4 - core index']
  #allocation1 [shape = 'u32[144,128]{1,0:T(1,128)}', space=vmem, size = 0x12000, scoped, tag = 'internal scratch']
  #allocation2 [shape = 'f32[8,1]{1,0:T(8,128)}', space=vmem, size = 0x1000, scoped, tag = 'scratch operand']
  #allocation3 [shape = 'f32[8,1]{1,0:T(8,128)}', space=vmem, size = 0x1000, scoped, tag = 'scratch operand']
  %s0 = inlined_call_operand.hbm [shape: f32[2,8,256], index: 0, kind: input, shape index: {}]
  %s1 = inlined_call_operand.vmem [shape: f32[8,1], index: 1, kind: output, shape index: {0}]
  %s2 = inlined_call_operand.vmem [shape: f32[8,1], index: 2, kind: output, shape index: {1}]
  %3 = xla_tuple %s1, %s2
  %s4 = sld [smem:[#allocation0]]
  $region57: #{tpu_custom_call.1} parent=0
    _
  %s6 = ssub.s32 1, %s4
  %s7 = scalar_select 0, %s6, %s4
  $region1: #{tpu_custom_call.1} parent=0
    #allocation4 [shape = 'u8[16384]{0}', space=vmem, size = 0x4000, scoped, tag = 'input window, operand 0']
    #allocation5 [shape = 's32[2]{0}', space=sflag, size = 0x8, scoped, tag = 'scoped memory for tpu_custom_call.1']
    %8 = vsyncpa [#allocation5], 0
    %s9 = scalar_lea.sflag [#allocation5], 1
    %10 = vsyncpa %s9, 0
    loop: start=0, step=1, limit=4
    $region2: #{tpu_custom_call.1} parent=1 // loop_pre_header
      _
    $region3: #{tpu_custom_call.1} parent=1 // loop_header
      %s12 = sphi 0, %s16
      %p13 = scmp.ge.s32.totalorder %s12, 4
      %s22 = sphi 0, %s24
      %s25 = sphi 0, %s22
      %s26 = sphi 0, %s25
      %s42 = sphi 0, %s26
      %s46 = sphi 0, %s46
      %s48 = sphi 0, %s46
      %s49 = sphi 0, %s48
      %s63 = sphi 0, %s49
      %s67 = sphi 0, %s67
      %s69 = sphi 0, %s67
      %s70 = sphi 0, %s69
      %s84 = sphi 0, %s70
    $region4: #{tpu_custom_call.1} parent=1 // loop_header_branch
      %15 = sbr.rel (%p13) target = $region8
    $region5: #{tpu_custom_call.1} parent=1 // loop_body
      %s17 = ssub.s32 %s12, 1
      %s18 = ssub.s32 %s12, 2
      %s19 = sadd.s32 %s12, 1
      %s20 = ssub.s32 %s12, %s19
      %p21 = scmp.eq.s32.totalorder %s20, 0
      %s23 = sadd.s32 %s22, 1
      %s24 = scalar_select %p21, %s22, %s23
      %p27 = pneg %p21
      %p28 = scmp.eq.s32.totalorder %s12, 1
      %p29 = por %p27, %p28
      %p30 = scmp.ne.s32.totalorder %s22, %s25
      %p31 = scmp.eq.s32.totalorder %s12, 0
      %p32 = por %p30, %p31
      %p33 = scmp.ne.s32.totalorder %s22, %s25
      %p34 = scmp.eq.s32.totalorder %s17, 1
      %p35 = por %p33, %p34
      %p36 = scmp.ne.s32.totalorder %s25, %s26
      %p37 = scmp.eq.s32.totalorder %s17, 0
      %p38 = por %p36, %p37
      %p39 = scmp.ne.s32.totalorder %s25, %s26
      %p40 = scmp.eq.s32.totalorder %s18, 1
      %p41 = por %p39, %p40
      %p43 = scmp.ne.s32.totalorder %s26, %s42
      %p44 = scmp.eq.s32.totalorder %s18, 0
      %p45 = por %p43, %p44
      %s47 = sadd.s32 %s46, 1
      %p50 = scmp.eq.s32.totalorder %s12, 1
      %p51 = scmp.ne.s32.totalorder %s46, %s48
      %p52 = scmp.eq.s32.totalorder %s12, 0
      %p53 = por %p51, %p52
      %p54 = scmp.ne.s32.totalorder %s46, %s48
      %p55 = scmp.eq.s32.totalorder %s17, 1
      %p56 = por %p54, %p55
      %p57 = scmp.ne.s32.totalorder %s48, %s49
      %p58 = scmp.eq.s32.totalorder %s17, 0
      %p59 = por %p57, %p58
      %p60 = scmp.ne.s32.totalorder %s48, %s49
      %p61 = scmp.eq.s32.totalorder %s18, 1
      %p62 = por %p60, %p61
      %p64 = scmp.ne.s32.totalorder %s49, %s63
      %p65 = scmp.eq.s32.totalorder %s18, 0
      %p66 = por %p64, %p65
      %s68 = sadd.s32 %s67, 1
      %p71 = scmp.eq.s32.totalorder %s12, 1
      %p72 = scmp.ne.s32.totalorder %s67, %s69
      %p73 = scmp.eq.s32.totalorder %s12, 0
      %p74 = por %p72, %p73
      %p75 = scmp.ne.s32.totalorder %s67, %s69
      %p76 = scmp.eq.s32.totalorder %s17, 1
      %p77 = por %p75, %p76
      %p78 = scmp.ne.s32.totalorder %s69, %s70
      %p79 = scmp.eq.s32.totalorder %s17, 0
      %p80 = por %p78, %p79
      %p81 = scmp.ne.s32.totalorder %s69, %s70
      %p82 = scmp.eq.s32.totalorder %s18, 1
      %p83 = por %p81, %p82
      %p85 = scmp.ne.s32.totalorder %s70, %s84
      %p86 = scmp.eq.s32.totalorder %s18, 0
      %p87 = por %p85, %p86
      %p88 = scmp.le.s32.totalorder 1, %s12
      %p89 = scmp.lt.s32.totalorder %s12, 3
      %p90 = pnand %p88, %p89
      %p91 = pneg %p90
      // Predicated region
      $region9: #{tpu_custom_call.1} parent=5 // pred_check
        _
      $region10: #{tpu_custom_call.1} parent=5 // pred_check_branch
        %93 = sbr.rel (%p90) target = $region12
      $region11: #{tpu_custom_call.1} parent=5 // pred_region
        %s94 = ssub.s32 %s12, 1
      $region12: #{tpu_custom_call.1} parent=5 // pred_fallthru
        _
      %p95 = scmp.lt.s32.totalorder %s12, 2
      // Predicated region
      $region13: #{tpu_custom_call.1} parent=5 // pred_check
        %p96 = pneg %p95
      $region14: #{tpu_custom_call.1} parent=5 // pred_check_branch
        %98 = sbr.rel (%p96) target = $region16
      $region15: #{tpu_custom_call.1} parent=5 // pred_region
        // Predicated region
        $region17: #{tpu_custom_call.1} parent=15 // pred_check
          %p99 = pneg %p32
        $region18: #{tpu_custom_call.1} parent=15 // pred_check_branch
          %101 = sbr.rel (%p99) target = $region20
        $region19: #{tpu_custom_call.1} parent=15 // pred_region
          %s102 = sand.u32 %s22, 1
          %s103 = scalar_lea.sflag [#allocation5], %s102
          %s104 = sand.u32 %s22, 1
          %s105 = smul.addr %s104, 16
          %s106 = scalar_lea.vmem [#allocation4], %s105
          %s108 = ssub.s32 256, 256
          %109 = vsyncadd %s103, %s108
          %s110 = smul.addr %s12, 2
          %s111 = smul.addr %s110, 128
          %s112 = scalar_lea.hbm %s0, %s111
          %s114 = sshll.u32 %s106, 4
          %s115 = int_to_ptr.vmem [resolvable:$true] %s114
          %117 = dma.hbm_to_vmem [thread:$0]  %s112, 256, %s115, %s103
        $region20: #{tpu_custom_call.1} parent=15 // pred_fallthru
          _
      $region16: #{tpu_custom_call.1} parent=5 // pred_fallthru
        _
      %p118 = scmp.le.s32.totalorder 1, %s12
      %p119 = scmp.lt.s32.totalorder %s12, 3
      %p120 = pnand %p118, %p119
      %p121 = pneg %p120
      // Predicated region
      $region21: #{tpu_custom_call.1} parent=5 // pred_check
        _
      $region22: #{tpu_custom_call.1} parent=5 // pred_check_branch
        %123 = sbr.rel (%p120) target = $region24
      $region23: #{tpu_custom_call.1} parent=5 // pred_region
        %s124 = ssub.s32 %s12, 1
        %s125 = sand.u32 %s25, 1
        %s126 = scalar_lea.sflag [#allocation5], %s125
        %s127 = sand.u32 %s25, 1
        %s128 = smul.addr %s127, 16
        %s129 = scalar_lea.vmem [#allocation4], %s128
        // Predicated region
        $region25: #{tpu_custom_call.1} parent=23 // pred_check
          %p130 = pneg %p38
        $region26: #{tpu_custom_call.1} parent=23 // pred_check_branch
          %132 = sbr.rel (%p130) target = $region28
        $region27: #{tpu_custom_call.1} parent=23 // pred_region
          %133 = dma.done %s126, 256
        $region28: #{tpu_custom_call.1} parent=23 // pred_fallthru
          _
        %s134 = sand.u32 %s25, 1
        %s135 = scalar_lea.sflag [#allocation5], %s134
        %s136 = sand.u32 %s25, 1
        %s137 = smul.addr %s136, 16
        %s138 = scalar_lea.vmem [#allocation4], %s137
        %p139 = pneg %p38
        %p140 = pneg %p35
        %p141 = pneg %p59
        %p142 = pneg %p56
        %p143 = pneg %p80
        %p144 = pneg %p77
        %p145 = scmp.eq.s32.totalorder %s17, 0
        // Predicated region
        $region29: #{tpu_custom_call.1} parent=23 // pred_check
          %p146 = pneg %p145
        $region30: #{tpu_custom_call.1} parent=23 // pred_check_branch
          %148 = sbr.rel (%p146) target = $region32
        $region31: #{tpu_custom_call.1} parent=23 // pred_region
          %vm149 = vcmask 7168
          %150 = vst.msk [vmem:[#allocation2] sm:$0xff] %vm149, 0.0
          %151 = vst.msk [vmem:[#allocation3] sm:$0xff] %vm149, 0.0
        $region32: #{tpu_custom_call.1} parent=23 // pred_fallthru
          _
        %v152 = vld [vmem:[%s129] sm:$0xff]
        %v153 = vld [vmem:[%s129 + $0x8] sm:$0xff]
        %v154 = vld [vmem:[#allocation2] sm:$0xff]
        %v155 = vadd.f32 %v152, %v153
        %156 = vadd.xlane.f32.xlu0 %v155
        %v157 = vpop.xlane.xlu0 %156
        %v158 = vadd.f32 %v154, %v157
        %vm159 = vcmask 7168
        %160 = vst.msk [vmem:[#allocation2] sm:$0xff] %vm159, %v158
        %v161 = vld [vmem:[#allocation3] sm:$0xff]
        %v162 = vmul.f32 %v152, %v152
        %v163 = vmul.f32 %v153, %v153
        %v164 = vadd.f32 %v162, %v163
        %165 = vadd.xlane.f32.xlu0 %v164
        %v166 = vpop.xlane.xlu0 %165
        %v167 = vadd.f32 %v161, %v166
        %168 = vst.msk [vmem:[#allocation3] sm:$0xff] %vm159, %v167
        %p169 = scmp.eq.s32.totalorder %s17, 1
        // Predicated region
        $region33: #{tpu_custom_call.1} parent=23 // pred_check
          %p170 = pneg %p169
        $region34: #{tpu_custom_call.1} parent=23 // pred_check_branch
          %172 = sbr.rel (%p170) target = $region36
        $region35: #{tpu_custom_call.1} parent=23 // pred_region
          %v173 = vld [vmem:[#allocation2] sm:$0xff]
          %v174 = vmul.f32 %v173, 0.001953125
          %v175 = vld [vmem:[#allocation3] sm:$0xff]
          %v176 = vmul.f32 %v175, 0.001953125
          %v177 = vmul.f32 %v174, %v174
          %v178 = vsub.f32 %v176, %v177
          %v179 = vmax.f32 %v178, 0.0
          %v180 = vadd.f32 %v179, 1e-05
          %v181 = vrsqrt.pop %v180
          %182 = vst.msk [vmem:[%s1] sm:$0xff] %vm159, %v181
          %v183 = vmul.f32 %v174, %v181
          %184 = vst.msk [vmem:[%s2] sm:$0xff] %vm159, %v183
        $region36: #{tpu_custom_call.1} parent=23 // pred_fallthru
          _
        // Predicated region
        $region37: #{tpu_custom_call.1} parent=23 // pred_check
          %p185 = pneg %p56
        $region38: #{tpu_custom_call.1} parent=23 // pred_check_branch
          %187 = sbr.rel (%p185) target = $region40
        $region39: #{tpu_custom_call.1} parent=23 // pred_region
          _
        $region40: #{tpu_custom_call.1} parent=23 // pred_fallthru
          _
        // Predicated region
        $region41: #{tpu_custom_call.1} parent=23 // pred_check
          %p188 = pneg %p77
        $region42: #{tpu_custom_call.1} parent=23 // pred_check_branch
          %190 = sbr.rel (%p188) target = $region44
        $region43: #{tpu_custom_call.1} parent=23 // pred_region
          _
        $region44: #{tpu_custom_call.1} parent=23 // pred_fallthru
          _
        // Predicated region
        $region45: #{tpu_custom_call.1} parent=23 // pred_check
          %p191 = pneg %p56
        $region46: #{tpu_custom_call.1} parent=23 // pred_check_branch
          %193 = sbr.rel (%p191) target = $region48
        $region47: #{tpu_custom_call.1} parent=23 // pred_region
          _
        $region48: #{tpu_custom_call.1} parent=23 // pred_fallthru
          _
        // Predicated region
        $region49: #{tpu_custom_call.1} parent=23 // pred_check
          %p194 = pneg %p77
        $region50: #{tpu_custom_call.1} parent=23 // pred_check_branch
          %196 = sbr.rel (%p194) target = $region52
        $region51: #{tpu_custom_call.1} parent=23 // pred_region
          _
        $region52: #{tpu_custom_call.1} parent=23 // pred_fallthru
          _
      $region24: #{tpu_custom_call.1} parent=5 // pred_fallthru
        _
      %p197 = scmp.le.s32.totalorder 2, %s12
      // Predicated region
      $region53: #{tpu_custom_call.1} parent=5 // pred_check
        %p198 = pneg %p197
      $region54: #{tpu_custom_call.1} parent=5 // pred_check_branch
        %200 = sbr.rel (%p198) target = $region56
      $region55: #{tpu_custom_call.1} parent=5 // pred_region
        %s201 = ssub.s32 %s12, 2
      $region56: #{tpu_custom_call.1} parent=5 // pred_fallthru
        _
    $region6: #{tpu_custom_call.1} parent=1 // loop_footer
      %s16 = sadd.s32 1, %s12
    $region7: #{tpu_custom_call.1} parent=1 // loop_footer_branch
      %11 = sbr.rel target = $region3
    $region8: #{tpu_custom_call.1} parent=1 // loop_exit
      _
    %202 = vsyncpa [#allocation5], 1
    %s203 = scalar_lea.sflag [#allocation5], 1
    %204 = vsyncpa %s203, 1

</llo_original>
